<compile_context>
chip_gen: v7x
topology: tpu7x:2x2x1
jax: 0.10.0
libtpu: 0.0.40
codegen_flags: <defaults>
</compile_context>

<pallas_src>
import functools

import jax
import jax.numpy as jnp
from jax import lax
from jax.experimental import pallas as pl
from jax.experimental.pallas import tpu as pltpu

LRELU_SLOPE = 0.1
BN_EPS = 1e-5


def _round_up(x, m):
    return (x + m - 1) // m * m


# ----------------------------------------------------------------------------
# Pass 1: conv (taps folded into K) + per-tile per-channel sum / sum-of-squares.
# ----------------------------------------------------------------------------
def _conv_stats_kernel(x_hbm, w_ref, y_ref, sum_ref, sq_ref,
                       xbuf, patches, sem, *,
                       tap_offsets, cin_p, tm, tl, wp, wo, mn):
    n = pl.program_id(0)      # batch element        ("parallel")
    j = pl.program_id(1)      # M tile within image  ("arbitrary" -> sequential)
    gm = pl.num_programs(1)

    def window_copy(tile_idx, slot):
        start = pl.multiple_of(tile_idx * tm, 128)
        return pltpu.make_async_copy(
            x_hbm.at[n, :, pl.ds(start, tl)], xbuf.at[slot], sem.at[slot])

    # Prime the double buffer at the first tile of each image.
    @pl.when(j == 0)
    def _():
        window_copy(j, 0).start()

    # Prefetch the next tile (same image) into the other slot.
    @pl.when(j + 1 < gm)
    def _():
        window_copy(j + 1, (j + 1) % 2).start()

    slot = j % 2
    window_copy(j, slot).wait()

    # Build the stacked patch operand (KT*Cin_p, TM): tap t occupies sublanes
    # [t*Cin_p, (t+1)*Cin_p) and is a statically shifted lane slice of the
    # window.  The shift cost is paid once here, then a single big-K matmul.
    # TODO(synk): optionally split the window DMA into KH per-row copies so the
    #             kh*Wp part of the shift is absorbed into DMA addressing.
    xb = xbuf.at[slot]
    for t, off in enumerate(tap_offsets):
        patches[t * cin_p:(t + 1) * cin_p, :] = xb[:, off:off + tm]

    acc = jnp.dot(w_ref[...], patches[...], preferred_element_type=jnp.float32)
    y_ref[0] = acc.astype(y_ref.dtype)                 # lane-dense bf16 store

    # Per-channel sum / sum-of-squares over VALID output positions only
    # (exclude width-garbage columns and the pad-to-Mpad tail).  Lane (XLU)
    # reductions, so the MXU is left free for the conv matmuls.
    pos = j * tm + lax.broadcasted_iota(jnp.int32, (1, tm), 1)
    valid = ((pos % wp) < wo) & (pos < mn)
    am = acc * valid.astype(jnp.float32)               # masked activations
    sum_ref[0, 0] = jnp.sum(am, axis=-1, keepdims=True)
    sq_ref[0, 0] = jnp.sum(am * acc, axis=-1, keepdims=True)


# ----------------------------------------------------------------------------
# Pass 2: y * scale + shift (folded BN) and LeakyReLU(0.1).  Pure bandwidth.
# ----------------------------------------------------------------------------
def _bn_lrelu_kernel(y_ref, scale_ref, shift_ref, o_ref, *, apply_act):
    z = y_ref[0].astype(jnp.float32) * scale_ref[...] + shift_ref[...]
    if apply_act:
        z = jnp.where(z >= 0, z, LRELU_SLOPE * z)
    o_ref[0] = z                                       # lane-dense f32 store


# ----------------------------------------------------------------------------
# Wrapper (NCHW in / NCHW out, PyTorch semantics).
# ----------------------------------------------------------------------------
def conv_block_forward(x_nchw, weight_oihw, gamma=None, beta=None, bias=None, *,
                       stride=1, padding=1, batch_norm=True,
                       block_m=512, vmem_limit_mb=48):
    if stride != 1:
        # TODO(synk): stride > 1 not supported by this flattened-width lowering.
        raise NotImplementedError("conv_block Pallas kernel supports stride=1")

    N, Cin, H, W = x_nchw.shape
    Cout, cin_w, KH, KW = weight_oihw.shape
    assert cin_w == Cin
    KT = KH * KW

    Hp, Wp = H + 2 * padding, W + 2 * padding
    Ho, Wo = Hp - KH + 1, Wp - KW + 1
    Mn = Ho * Wp                               # per-image GEMM cols (incl. garbage cols)
    Cin_p = _round_up(Cin, 16)                 # bf16 sublane packing
    Cout_p = _round_up(Cout, 16)

    TM = min(_round_up(block_m, 128), _round_up(Mn, 128))   # lane tile, mult of 128
    GM = pl.cdiv(Mn, TM)
    Mpad = GM * TM
    max_off = (KH - 1) * Wp + (KW - 1)         # largest tap offset
    TL = _round_up(TM + max_off, 128)          # 128-aligned window length per tile
    L_x = (GM - 1) * TM + TL                   # flattened input length incl. halo

    # ---- glue: pad + flatten input to channels-major (N, Cin_p, L_x), bf16 ----
    xp = jnp.pad(x_nchw, ((0, 0), (0, Cin_p - Cin),
                          (padding, padding), (padding, padding)))
    xf = xp.reshape(N, Cin_p, Hp * Wp)
    xf = jnp.pad(xf, ((0, 0), (0, 0), (0, L_x - Hp * Wp))).astype(jnp.bfloat16)

    # ---- weights (Cout,Cin,KH,KW) -> (Cout_p, KT*Cin_p) bf16 (taps in K) ----
    wpad = jnp.pad(weight_oihw,
                   ((0, Cout_p - Cout), (0, Cin_p - Cin), (0, 0), (0, 0)))
    w2 = jnp.transpose(wpad, (0, 2, 3, 1)).reshape(Cout_p, KT * Cin_p)
    w2 = w2.astype(jnp.bfloat16)

    tap_offsets = tuple(kh * Wp + kw for kh in range(KH) for kw in range(KW))
    vmem_limit = vmem_limit_mb * 1024 * 1024

    kernel1 = functools.partial(
        _conv_stats_kernel, tap_offsets=tap_offsets, cin_p=Cin_p,
        tm=TM, tl=TL, wp=Wp, wo=Wo, mn=Mn)
    # TODO(synk): for very deep layers on v7x (64 MiB VMEM/TC) add a Cout tile
    #             grid axis and/or single-buffer the resident weight block.
    yconv, psum, psq = pl.pallas_call(
        kernel1,
        out_shape=(jax.ShapeDtypeStruct((N, Cout_p, Mpad), jnp.bfloat16),
                   jax.ShapeDtypeStruct((N, GM, Cout_p, 1), jnp.float32),
                   jax.ShapeDtypeStruct((N, GM, Cout_p, 1), jnp.float32)),
        grid=(N, GM),
        in_specs=[
            pl.BlockSpec(memory_space=pl.ANY),                        # input stays in HBM
            pl.BlockSpec((Cout_p, KT * Cin_p), lambda n, j: (0, 0)),  # resident weights
        ],
        out_specs=(
            pl.BlockSpec((1, Cout_p, TM), lambda n, j: (n, 0, j)),    # lane-dense bf16 conv
            pl.BlockSpec((1, 1, Cout_p, 1), lambda n, j: (n, j, 0, 0)),
            pl.BlockSpec((1, 1, Cout_p, 1), lambda n, j: (n, j, 0, 0)),
        ),
        scratch_shapes=[
            pltpu.VMEM((2, Cin_p, TL), jnp.bfloat16),                 # double-buffered window
            pltpu.VMEM((KT * Cin_p, TM), jnp.bfloat16),               # stacked patches
            pltpu.SemaphoreType.DMA((2,)),
        ],
        compiler_params=pltpu.CompilerParams(
            dimension_semantics=("parallel", "arbitrary"),
            vmem_limit_bytes=vmem_limit),
    )(xf, w2)

    # ---- finalize folded BN affine (tiny per-channel math, plain JAX glue) ----
    count = float(N * Ho * Wo)
    s1 = psum.sum(axis=(0, 1))[:, 0]
    s2 = psq.sum(axis=(0, 1))[:, 0]
    if batch_norm:
        # TODO(synk): E[x^2]-E[x]^2 in f32 can cancel for large activation means;
        #             switch to a shifted/centered accumulation if BN drifts.
        mean = s1 / count
        var = jnp.maximum(s2 / count - mean * mean, 0.0)   # biased batch variance
        gamma_p = jnp.pad(gamma.astype(jnp.float32), (0, Cout_p - Cout))
        beta_p = jnp.pad(beta.astype(jnp.float32), (0, Cout_p - Cout))
        scale = gamma_p * lax.rsqrt(var + BN_EPS)
        shift = beta_p - mean * scale
    else:
        bias_p = jnp.pad(bias.astype(jnp.float32), (0, Cout_p - Cout))
        scale = jnp.ones((Cout_p,), jnp.float32)
        shift = bias_p

    # ---- pass 2: pure-HBM-bandwidth epilogue, larger tile ----
    budget_cols = max(TM, (16 * 1024 * 1024) // (Cout_p * 6 * 2))
    TM2 = TM
    for k in range(GM, 0, -1):
        if GM % k == 0 and k * TM <= budget_cols:
            TM2 = k * TM
            break
    GM2 = Mpad // TM2

    kernel2 = functools.partial(_bn_lrelu_kernel, apply_act=batch_norm)
    out_flat = pl.pallas_call(
        kernel2,
        out_shape=jax.ShapeDtypeStruct((N, Cout_p, Mpad), jnp.float32),
        grid=(N, GM2),
        in_specs=[
            pl.BlockSpec((1, Cout_p, TM2), lambda n, j: (n, 0, j)),
            pl.BlockSpec((Cout_p, 1), lambda n, j: (0, 0)),
            pl.BlockSpec((Cout_p, 1), lambda n, j: (0, 0)),
        ],
        out_specs=pl.BlockSpec((1, Cout_p, TM2), lambda n, j: (n, 0, j)),
        compiler_params=pltpu.CompilerParams(
            dimension_semantics=("parallel", "parallel"),
            vmem_limit_bytes=vmem_limit),
    )(yconv, scale.reshape(Cout_p, 1), shift.reshape(Cout_p, 1))

    # Drop padded channels, the Mpad tail and the width-garbage columns.
    # Result is already NCHW ordered -> no transpose.
    out = out_flat[:, :Cout, :Mn].reshape(N, Cout, Ho, Wp)[..., :Wo]
    return out


# ----------------------------------------------------------------------------
# Pure-JAX reference mirroring the PyTorch forward (training-mode BN).
# ----------------------------------------------------------------------------
def conv_block_reference(x, w, gamma, beta, *, stride=1, padding=1):
    y = lax.conv_general_dilated(
        x, w, (stride, stride), [(padding, padding), (padding, padding)],
        dimension_numbers=("NCHW", "OIHW", "NCHW"))
    mean = y.mean(axis=(0, 2, 3), keepdims=True)
    var = ((y - mean) ** 2).mean(axis=(0, 2, 3), keepdims=True)
    y_hat = (y - mean) / jnp.sqrt(var + BN_EPS)
    z = gamma.reshape(1, -1, 1, 1) * y_hat + beta.reshape(1, -1, 1, 1)
    return jnp.where(z >= 0, z, LRELU_SLOPE * z)


if __name__ == "__main__":
    # conv_block(in_channels=4, out_channels=8, kernel_size=3, stride=1, padding=1)
    N, Cin, H, W = 2, 4, 16, 16
    Cout, KH, KW = 8, 3, 3

    key = jax.random.PRNGKey(0)
    kx, kw_, kg, kb = jax.random.split(key, 4)
    x = jax.random.normal(kx, (N, Cin, H, W), dtype=jnp.float32)
    weight = 0.1 * jax.random.normal(kw_, (Cout, Cin, KH, KW), dtype=jnp.float32)
    gamma = 1.0 + 0.1 * jax.random.normal(kg, (Cout,), dtype=jnp.float32)   # BN weight
    beta = 0.1 * jax.random.normal(kb, (Cout,), dtype=jnp.float32)          # BN bias

    # block_m=128 -> GM=3 tiles per image: exercises the double-buffered window
    # DMA (prime / prefetch / drain) and the multi-tile grid on toy shapes.
    out = conv_block_forward(x, weight, gamma, beta,
                             stride=1, padding=1, block_m=128)
    out = jax.block_until_ready(out)

    ref = conv_block_reference(x, weight, gamma, beta)
    assert out.shape == (N, Cout, H, W), out.shape
    err = float(jnp.abs(out - ref).max())
    assert jnp.allclose(out, ref, rtol=1e-2, atol=2e-2), err   # bf16 MXU tolerance

    print("KERNEL_OK")
</pallas_src>

<mosaic_0001>
module attributes {stable_mosaic.version = 11 : i64} {
  func.func @_conv_stats_kernel(%arg0: i32, %arg1: i32, %arg2: memref<2x16x512xbf16, #tpu.memory_space<any>>, %arg3: memref<16x144xbf16, #tpu.memory_space<vmem>>, %arg4: memref<1x16x128xbf16, #tpu.memory_space<vmem>>, %arg5: memref<1x1x16x1xf32, #tpu.memory_space<vmem>>, %arg6: memref<1x1x16x1xf32, #tpu.memory_space<vmem>>, %arg7: memref<2x16x256xbf16, #tpu.memory_space<vmem>>, %arg8: memref<144x128xbf16, #tpu.memory_space<vmem>>, %arg9: memref<2x!tpu.dma_semaphore, #tpu.memory_space<semaphore_mem>>) attributes {dimension_semantics = [#tpu.dimension_semantics<parallel>, #tpu.dimension_semantics<arbitrary>], iteration_bounds = array<i64: 2, 3>, scalar_prefetch = 0 : i64, scratch_operands = 3 : i64, tpu.core_type = #tpu.core_type<tc>, window_params = [{}, {pipeline_mode = #tpu.pipeline_mode<synchronous>, transform_indices = @transform_1, window_bounds = array<i64: 16, 144>}, {transform_indices = @transform_2, window_bounds = array<i64: 1, 16, 128>}, {transform_indices = @transform_3, window_bounds = array<i64: 1, 1, 16, 1>}, {transform_indices = @transform_4, window_bounds = array<i64: 1, 1, 16, 1>}]} {
    %c0_i32 = arith.constant 0 : i32
    %0 = arith.cmpi eq, %arg1, %c0_i32 : i32
    %1 = arith.extui %0 : i1 to i32
    %c0_i32_0 = arith.constant 0 : i32
    %2 = arith.cmpi ne, %1, %c0_i32_0 : i32
    scf.if %2 {
      %c128_i32_70 = arith.constant 128 : i32
      %108 = arith.muli %arg1, %c128_i32_70 : i32
      %109 = tpu.assume_multiple %108, 128 : i32
      %c0_i32_71 = arith.constant 0 : i32
      %c0_i32_72 = arith.constant 0 : i32
      %c0_i32_73 = arith.constant 0 : i32
      %110 = tpu.memref_slice %arg2[%arg0, %c0_i32_73, %109] : memref<2x16x512xbf16, #tpu.memory_space<any>> -> memref<1x16x256xbf16, #tpu.memory_space<any>>
      %111 = tpu.memref_squeeze %110 : memref<1x16x256xbf16, #tpu.memory_space<any>> -> memref<16x256xbf16, #tpu.memory_space<any>>
      %c0_i32_74 = arith.constant 0 : i32
      %c0_i32_75 = arith.constant 0 : i32
      %112 = tpu.memref_slice %arg7[%c0_i32_71, %c0_i32_74, %c0_i32_75] : memref<2x16x256xbf16, #tpu.memory_space<vmem>> -> memref<1x16x256xbf16, #tpu.memory_space<vmem>>
      %113 = tpu.memref_squeeze %112 : memref<1x16x256xbf16, #tpu.memory_space<vmem>> -> memref<16x256xbf16, #tpu.memory_space<vmem>>
      %114 = tpu.memref_slice %arg9[%c0_i32_72] : memref<2x!tpu.dma_semaphore, #tpu.memory_space<semaphore_mem>> -> memref<1x!tpu.dma_semaphore, #tpu.memory_space<semaphore_mem>>
      %115 = tpu.memref_squeeze %114 : memref<1x!tpu.dma_semaphore, #tpu.memory_space<semaphore_mem>> -> memref<!tpu.dma_semaphore, #tpu.memory_space<semaphore_mem>>
      tpu.enqueue_dma source(%111 : memref<16x256xbf16, #tpu.memory_space<any>>) target(%113 : memref<16x256xbf16, #tpu.memory_space<vmem>>) target_semaphore(%115 : memref<!tpu.dma_semaphore, #tpu.memory_space<semaphore_mem>>)
    } else {
    }
    %c1_i32 = arith.constant 1 : i32
    %3 = arith.addi %arg1, %c1_i32 : i32
    %c3_i32 = arith.constant 3 : i32
    %4 = arith.cmpi slt, %3, %c3_i32 : i32
    %5 = arith.extui %4 : i1 to i32
    %c0_i32_1 = arith.constant 0 : i32
    %6 = arith.cmpi ne, %5, %c0_i32_1 : i32
    scf.if %6 {
      %c1_i32_70 = arith.constant 1 : i32
      %108 = arith.addi %arg1, %c1_i32_70 : i32
      %c1_i32_71 = arith.constant 1 : i32
      %109 = arith.addi %arg1, %c1_i32_71 : i32
      %c2_i32_72 = arith.constant 2 : i32
      %c0_i32_73 = arith.constant 0 : i32
      %110 = arith.cmpi eq, %c2_i32_72, %c0_i32_73 : i32
      %c1_i32_74 = arith.constant 1 : i32
      %111 = arith.select %110, %c1_i32_74, %c2_i32_72 : i32
      %112 = arith.remsi %109, %111 : i32
      %c0_i32_75 = arith.constant 0 : i32
      %113 = arith.cmpi ne, %112, %c0_i32_75 : i32
      %c0_i32_76 = arith.constant 0 : i32
      %114 = arith.cmpi slt, %112, %c0_i32_76 : i32
      %c0_i32_77 = arith.constant 0 : i32
      %115 = arith.cmpi slt, %111, %c0_i32_77 : i32
      %116 = arith.xori %114, %115 : i1
      %117 = arith.andi %116, %113 : i1
      %118 = arith.addi %112, %111 : i32
      %119 = arith.select %117, %118, %112 : i32
      %c128_i32_78 = arith.constant 128 : i32
      %120 = arith.muli %108, %c128_i32_78 : i32
      %121 = tpu.assume_multiple %120, 128 : i32
      %c0_i32_79 = arith.constant 0 : i32
      %122 = tpu.memref_slice %arg2[%arg0, %c0_i32_79, %121] : memref<2x16x512xbf16, #tpu.memory_space<any>> -> memref<1x16x256xbf16, #tpu.memory_space<any>>
      %123 = tpu.memref_squeeze %122 : memref<1x16x256xbf16, #tpu.memory_space<any>> -> memref<16x256xbf16, #tpu.memory_space<any>>
      %c0_i32_80 = arith.constant 0 : i32
      %c0_i32_81 = arith.constant 0 : i32
      %124 = tpu.memref_slice %arg7[%119, %c0_i32_80, %c0_i32_81] : memref<2x16x256xbf16, #tpu.memory_space<vmem>> -> memref<1x16x256xbf16, #tpu.memory_space<vmem>>
      %125 = tpu.memref_squeeze %124 : memref<1x16x256xbf16, #tpu.memory_space<vmem>> -> memref<16x256xbf16, #tpu.memory_space<vmem>>
      %126 = tpu.memref_slice %arg9[%119] : memref<2x!tpu.dma_semaphore, #tpu.memory_space<semaphore_mem>> -> memref<1x!tpu.dma_semaphore, #tpu.memory_space<semaphore_mem>>
      %127 = tpu.memref_squeeze %126 : memref<1x!tpu.dma_semaphore, #tpu.memory_space<semaphore_mem>> -> memref<!tpu.dma_semaphore, #tpu.memory_space<semaphore_mem>>
      tpu.enqueue_dma source(%123 : memref<16x256xbf16, #tpu.memory_space<any>>) target(%125 : memref<16x256xbf16, #tpu.memory_space<vmem>>) target_semaphore(%127 : memref<!tpu.dma_semaphore, #tpu.memory_space<semaphore_mem>>)
    } else {
    }
    %c2_i32 = arith.constant 2 : i32
    %c0_i32_2 = arith.constant 0 : i32
    %7 = arith.cmpi eq, %c2_i32, %c0_i32_2 : i32
    %c1_i32_3 = arith.constant 1 : i32
    %8 = arith.select %7, %c1_i32_3, %c2_i32 : i32
    %9 = arith.remsi %arg1, %8 : i32
    %c0_i32_4 = arith.constant 0 : i32
    %10 = arith.cmpi ne, %9, %c0_i32_4 : i32
    %c0_i32_5 = arith.constant 0 : i32
    %11 = arith.cmpi slt, %9, %c0_i32_5 : i32
    %c0_i32_6 = arith.constant 0 : i32
    %12 = arith.cmpi slt, %8, %c0_i32_6 : i32
    %13 = arith.xori %11, %12 : i1
    %14 = arith.andi %13, %10 : i1
    %15 = arith.addi %9, %8 : i32
    %16 = arith.select %14, %15, %9 : i32
    %c128_i32 = arith.constant 128 : i32
    %17 = arith.muli %arg1, %c128_i32 : i32
    %18 = tpu.assume_multiple %17, 128 : i32
    %c0_i32_7 = arith.constant 0 : i32
    %19 = tpu.memref_slice %arg2[%arg0, %c0_i32_7, %18] : memref<2x16x512xbf16, #tpu.memory_space<any>> -> memref<1x16x256xbf16, #tpu.memory_space<any>>
    %20 = tpu.memref_squeeze %19 : memref<1x16x256xbf16, #tpu.memory_space<any>> -> memref<16x256xbf16, #tpu.memory_space<any>>
    %c0_i32_8 = arith.constant 0 : i32
    %c0_i32_9 = arith.constant 0 : i32
    %21 = tpu.memref_slice %arg7[%16, %c0_i32_8, %c0_i32_9] : memref<2x16x256xbf16, #tpu.memory_space<vmem>> -> memref<1x16x256xbf16, #tpu.memory_space<vmem>>
    %22 = tpu.memref_squeeze %21 : memref<1x16x256xbf16, #tpu.memory_space<vmem>> -> memref<16x256xbf16, #tpu.memory_space<vmem>>
    %23 = tpu.memref_slice %arg9[%16] : memref<2x!tpu.dma_semaphore, #tpu.memory_space<semaphore_mem>> -> memref<1x!tpu.dma_semaphore, #tpu.memory_space<semaphore_mem>>
    %24 = tpu.memref_squeeze %23 : memref<1x!tpu.dma_semaphore, #tpu.memory_space<semaphore_mem>> -> memref<!tpu.dma_semaphore, #tpu.memory_space<semaphore_mem>>
    tpu.wait_dma2 semaphore(%24 : memref<!tpu.dma_semaphore, #tpu.memory_space<semaphore_mem>>) src(%20 : memref<16x256xbf16, #tpu.memory_space<any>>) dst(%22 : memref<16x256xbf16, #tpu.memory_space<vmem>>)
    %c0_i32_10 = arith.constant 0 : i32
    %c0_i32_11 = arith.constant 0 : i32
    %25 = tpu.memref_slice %arg7[%16, %c0_i32_10, %c0_i32_11] : memref<2x16x256xbf16, #tpu.memory_space<vmem>> -> memref<1x16x256xbf16, #tpu.memory_space<vmem>>
    %26 = tpu.memref_squeeze %25 : memref<1x16x256xbf16, #tpu.memory_space<vmem>> -> memref<16x256xbf16, #tpu.memory_space<vmem>>
    %c0 = arith.constant 0 : index
    %c0_12 = arith.constant 0 : index
    %27 = vector.load %26[%c0, %c0_12] : memref<16x256xbf16, #tpu.memory_space<vmem>>, vector<16x128xbf16>
    %c0_13 = arith.constant 0 : index
    %c0_14 = arith.constant 0 : index
    %28 = vector.load %arg8[%c0_13, %c0_14] : memref<144x128xbf16, #tpu.memory_space<vmem>>, vector<16x128xbf16>
    tpu.vector_store %arg8[%c0_13, %c0_14], %27 {strides = array<i32>} : memref<144x128xbf16, #tpu.memory_space<vmem>>, vector<16x128xbf16>,
    %c0_i32_15 = arith.constant 0 : i32
    %c0_i32_16 = arith.constant 0 : i32
    %29 = tpu.memref_slice %arg7[%16, %c0_i32_15, %c0_i32_16] : memref<2x16x256xbf16, #tpu.memory_space<vmem>> -> memref<1x16x256xbf16, #tpu.memory_space<vmem>>
    %30 = tpu.memref_squeeze %29 : memref<1x16x256xbf16, #tpu.memory_space<vmem>> -> memref<16x256xbf16, #tpu.memory_space<vmem>>
    %c0_17 = arith.constant 0 : index
    %c1 = arith.constant 1 : index
    %31 = vector.load %30[%c0_17, %c1] : memref<16x256xbf16, #tpu.memory_space<vmem>>, vector<16x128xbf16>
    %c16 = arith.constant 16 : index
    %c0_18 = arith.constant 0 : index
    %32 = vector.load %arg8[%c16, %c0_18] : memref<144x128xbf16, #tpu.memory_space<vmem>>, vector<16x128xbf16>
    tpu.vector_store %arg8[%c16, %c0_18], %31 {strides = array<i32>} : memref<144x128xbf16, #tpu.memory_space<vmem>>, vector<16x128xbf16>,
    %c0_i32_19 = arith.constant 0 : i32
    %c0_i32_20 = arith.constant 0 : i32
    %33 = tpu.memref_slice %arg7[%16, %c0_i32_19, %c0_i32_20] : memref<2x16x256xbf16, #tpu.memory_space<vmem>> -> memref<1x16x256xbf16, #tpu.memory_space<vmem>>
    %34 = tpu.memref_squeeze %33 : memref<1x16x256xbf16, #tpu.memory_space<vmem>> -> memref<16x256xbf16, #tpu.memory_space<vmem>>
    %c0_21 = arith.constant 0 : index
    %c2 = arith.constant 2 : index
    %35 = vector.load %34[%c0_21, %c2] : memref<16x256xbf16, #tpu.memory_space<vmem>>, vector<16x128xbf16>
    %c32 = arith.constant 32 : index
    %c0_22 = arith.constant 0 : index
    %36 = vector.load %arg8[%c32, %c0_22] : memref<144x128xbf16, #tpu.memory_space<vmem>>, vector<16x128xbf16>
    tpu.vector_store %arg8[%c32, %c0_22], %35 {strides = array<i32>} : memref<144x128xbf16, #tpu.memory_space<vmem>>, vector<16x128xbf16>,
    %c0_i32_23 = arith.constant 0 : i32
    %c0_i32_24 = arith.constant 0 : i32
    %37 = tpu.memref_slice %arg7[%16, %c0_i32_23, %c0_i32_24] : memref<2x16x256xbf16, #tpu.memory_space<vmem>> -> memref<1x16x256xbf16, #tpu.memory_space<vmem>>
    %38 = tpu.memref_squeeze %37 : memref<1x16x256xbf16, #tpu.memory_space<vmem>> -> memref<16x256xbf16, #tpu.memory_space<vmem>>
    %c0_25 = arith.constant 0 : index
    %c18 = arith.constant 18 : index
    %39 = vector.load %38[%c0_25, %c18] : memref<16x256xbf16, #tpu.memory_space<vmem>>, vector<16x128xbf16>
    %c48 = arith.constant 48 : index
    %c0_26 = arith.constant 0 : index
    %40 = vector.load %arg8[%c48, %c0_26] : memref<144x128xbf16, #tpu.memory_space<vmem>>, vector<16x128xbf16>
    tpu.vector_store %arg8[%c48, %c0_26], %39 {strides = array<i32>} : memref<144x128xbf16, #tpu.memory_space<vmem>>, vector<16x128xbf16>,
    %c0_i32_27 = arith.constant 0 : i32
    %c0_i32_28 = arith.constant 0 : i32
    %41 = tpu.memref_slice %arg7[%16, %c0_i32_27, %c0_i32_28] : memref<2x16x256xbf16, #tpu.memory_space<vmem>> -> memref<1x16x256xbf16, #tpu.memory_space<vmem>>
    %42 = tpu.memref_squeeze %41 : memref<1x16x256xbf16, #tpu.memory_space<vmem>> -> memref<16x256xbf16, #tpu.memory_space<vmem>>
    %c0_29 = arith.constant 0 : index
    %c19 = arith.constant 19 : index
    %43 = vector.load %42[%c0_29, %c19] : memref<16x256xbf16, #tpu.memory_space<vmem>>, vector<16x128xbf16>
    %c64 = arith.constant 64 : index
    %c0_30 = arith.constant 0 : index
    %44 = vector.load %arg8[%c64, %c0_30] : memref<144x128xbf16, #tpu.memory_space<vmem>>, vector<16x128xbf16>
    tpu.vector_store %arg8[%c64, %c0_30], %43 {strides = array<i32>} : memref<144x128xbf16, #tpu.memory_space<vmem>>, vector<16x128xbf16>,
    %c0_i32_31 = arith.constant 0 : i32
    %c0_i32_32 = arith.constant 0 : i32
    %45 = tpu.memref_slice %arg7[%16, %c0_i32_31, %c0_i32_32] : memref<2x16x256xbf16, #tpu.memory_space<vmem>> -> memref<1x16x256xbf16, #tpu.memory_space<vmem>>
    %46 = tpu.memref_squeeze %45 : memref<1x16x256xbf16, #tpu.memory_space<vmem>> -> memref<16x256xbf16, #tpu.memory_space<vmem>>
    %c0_33 = arith.constant 0 : index
    %c20 = arith.constant 20 : index
    %47 = vector.load %46[%c0_33, %c20] : memref<16x256xbf16, #tpu.memory_space<vmem>>, vector<16x128xbf16>
    %c80 = arith.constant 80 : index
    %c0_34 = arith.constant 0 : index
    %48 = vector.load %arg8[%c80, %c0_34] : memref<144x128xbf16, #tpu.memory_space<vmem>>, vector<16x128xbf16>
    tpu.vector_store %arg8[%c80, %c0_34], %47 {strides = array<i32>} : memref<144x128xbf16, #tpu.memory_space<vmem>>, vector<16x128xbf16>,
    %c0_i32_35 = arith.constant 0 : i32
    %c0_i32_36 = arith.constant 0 : i32
    %49 = tpu.memref_slice %arg7[%16, %c0_i32_35, %c0_i32_36] : memref<2x16x256xbf16, #tpu.memory_space<vmem>> -> memref<1x16x256xbf16, #tpu.memory_space<vmem>>
    %50 = tpu.memref_squeeze %49 : memref<1x16x256xbf16, #tpu.memory_space<vmem>> -> memref<16x256xbf16, #tpu.memory_space<vmem>>
    %c0_37 = arith.constant 0 : index
    %c36 = arith.constant 36 : index
    %51 = vector.load %50[%c0_37, %c36] : memref<16x256xbf16, #tpu.memory_space<vmem>>, vector<16x128xbf16>
    %c96 = arith.constant 96 : index
    %c0_38 = arith.constant 0 : index
    %52 = vector.load %arg8[%c96, %c0_38] : memref<144x128xbf16, #tpu.memory_space<vmem>>, vector<16x128xbf16>
    tpu.vector_store %arg8[%c96, %c0_38], %51 {strides = array<i32>} : memref<144x128xbf16, #tpu.memory_space<vmem>>, vector<16x128xbf16>,
    %c0_i32_39 = arith.constant 0 : i32
    %c0_i32_40 = arith.constant 0 : i32
    %53 = tpu.memref_slice %arg7[%16, %c0_i32_39, %c0_i32_40] : memref<2x16x256xbf16, #tpu.memory_space<vmem>> -> memref<1x16x256xbf16, #tpu.memory_space<vmem>>
    %54 = tpu.memref_squeeze %53 : memref<1x16x256xbf16, #tpu.memory_space<vmem>> -> memref<16x256xbf16, #tpu.memory_space<vmem>>
    %c0_41 = arith.constant 0 : index
    %c37 = arith.constant 37 : index
    %55 = vector.load %54[%c0_41, %c37] : memref<16x256xbf16, #tpu.memory_space<vmem>>, vector<16x128xbf16>
    %c112 = arith.constant 112 : index
    %c0_42 = arith.constant 0 : index
    %56 = vector.load %arg8[%c112, %c0_42] : memref<144x128xbf16, #tpu.memory_space<vmem>>, vector<16x128xbf16>
    tpu.vector_store %arg8[%c112, %c0_42], %55 {strides = array<i32>} : memref<144x128xbf16, #tpu.memory_space<vmem>>, vector<16x128xbf16>,
    %c0_i32_43 = arith.constant 0 : i32
    %c0_i32_44 = arith.constant 0 : i32
    %57 = tpu.memref_slice %arg7[%16, %c0_i32_43, %c0_i32_44] : memref<2x16x256xbf16, #tpu.memory_space<vmem>> -> memref<1x16x256xbf16, #tpu.memory_space<vmem>>
    %58 = tpu.memref_squeeze %57 : memref<1x16x256xbf16, #tpu.memory_space<vmem>> -> memref<16x256xbf16, #tpu.memory_space<vmem>>
    %c0_45 = arith.constant 0 : index
    %c38 = arith.constant 38 : index
    %59 = vector.load %58[%c0_45, %c38] : memref<16x256xbf16, #tpu.memory_space<vmem>>, vector<16x128xbf16>
    %c128 = arith.constant 128 : index
    %c0_46 = arith.constant 0 : index
    %60 = vector.load %arg8[%c128, %c0_46] : memref<144x128xbf16, #tpu.memory_space<vmem>>, vector<16x128xbf16>
    tpu.vector_store %arg8[%c128, %c0_46], %59 {strides = array<i32>} : memref<144x128xbf16, #tpu.memory_space<vmem>>, vector<16x128xbf16>,
    %c0_47 = arith.constant 0 : index
    %c0_48 = arith.constant 0 : index
    %61 = vector.load %arg3[%c0_47, %c0_48] : memref<16x144xbf16, #tpu.memory_space<vmem>>, vector<16x144xbf16>
    %c0_49 = arith.constant 0 : index
    %c0_50 = arith.constant 0 : index
    %62 = vector.load %arg8[%c0_49, %c0_50] : memref<144x128xbf16, #tpu.memory_space<vmem>>, vector<144x128xbf16>
    %cst = arith.constant dense<0.000000e+00> : vector<16x128xf32>
    %63 = tpu.matmul %61, %62, %cst {dimension_numbers = #tpu.dot_dimension_numbers<[1], [0], [0], [1], [0, 0, 1, 1], [], []>} : vector<16x144xbf16>, vector<144x128xbf16>, vector<16x128xf32> -> vector<16x128xf32>
    %64 = arith.truncf %63 : vector<16x128xf32> to vector<16x128xbf16>
    %c0_51 = arith.constant 0 : index
    %c0_52 = arith.constant 0 : index
    %c0_53 = arith.constant 0 : index
    %65 = vector.load %arg4[%c0_51, %c0_52, %c0_53] : memref<1x16x128xbf16, #tpu.memory_space<vmem>>, vector<1x16x128xbf16>
    %66 = vector.shape_cast %65 : vector<1x16x128xbf16> to vector<16x128xbf16>
    %67 = vector.shape_cast %64 : vector<16x128xbf16> to vector<1x16x128xbf16>
    tpu.vector_store %arg4[%c0_51, %c0_52, %c0_53], %67 {strides = array<i32>} : memref<1x16x128xbf16, #tpu.memory_space<vmem>>, vector<1x16x128xbf16>,
    %c128_i32_54 = arith.constant 128 : i32
    %68 = arith.muli %arg1, %c128_i32_54 : i32
    %69 = tpu.iota {dimensions = array<i32: 1>} : vector<1x128xi32>
    %70 = vector.broadcast %68 : i32 to vector<1x128xi32>
    %71 = arith.addi %70, %69 : vector<1x128xi32>
    %c18_i32 = arith.constant 18 : i32
    %c0_i32_55 = arith.constant 0 : i32
    %72 = arith.cmpi eq, %c18_i32, %c0_i32_55 : i32
    %c1_i32_56 = arith.constant 1 : i32
    %73 = arith.select %72, %c1_i32_56, %c18_i32 : i32
    %74 = vector.broadcast %73 : i32 to vector<1x128xi32>
    %75 = arith.remsi %71, %74 : vector<1x128xi32>
    %c0_i32_57 = arith.constant 0 : i32
    %76 = vector.broadcast %c0_i32_57 : i32 to vector<1x128xi32>
    %77 = arith.cmpi ne, %75, %76 : vector<1x128xi32>
    %c0_i32_58 = arith.constant 0 : i32
    %78 = vector.broadcast %c0_i32_58 : i32 to vector<1x128xi32>
    %79 = arith.cmpi slt, %75, %78 : vector<1x128xi32>
    %c0_i32_59 = arith.constant 0 : i32
    %80 = arith.cmpi slt, %73, %c0_i32_59 : i32
    %81 = vector.broadcast %80 : i1 to vector<1x128xi1>
    %82 = vector.broadcast %81 : vector<1x128xi1> to vector<1x128xi1>
    %83 = arith.xori %79, %82 : vector<1x128xi1>
    %84 = arith.andi %83, %77 : vector<1x128xi1>
    %85 = vector.broadcast %73 : i32 to vector<1x128xi32>
    %86 = arith.addi %75, %85 : vector<1x128xi32>
    %87 = arith.select %84, %86, %75 : vector<1x128xi1>, vector<1x128xi32>
    %c16_i32 = arith.constant 16 : i32
    %88 = vector.broadcast %c16_i32 : i32 to vector<1x128xi32>
    %89 = arith.cmpi slt, %87, %88 : vector<1x128xi32>
    %c288_i32 = arith.constant 288 : i32
    %90 = vector.broadcast %c288_i32 : i32 to vector<1x128xi32>
    %91 = arith.cmpi slt, %71, %90 : vector<1x128xi32>
    %92 = arith.andi %89, %91 : vector<1x128xi1>
    %93 = arith.extui %92 : vector<1x128xi1> to vector<1x128xi32>
    %94 = arith.sitofp %93 : vector<1x128xi32> to vector<1x128xf32>
    %95 = vector.broadcast %94 : vector<1x128xf32> to vector<16x128xf32>
    %96 = arith.mulf %63, %95 : vector<16x128xf32>
    %cst_60 = arith.constant dense<0.000000e+00> : vector<16xf32>
    %97 = vector.multi_reduction <add>, %96, %cst_60 [1] : vector<16x128xf32> to vector<16xf32>
    %98 = vector.shape_cast %97 : vector<16xf32> to vector<16x1xf32>
    %c0_61 = arith.constant 0 : index
    %c0_62 = arith.constant 0 : index
    %c0_63 = arith.constant 0 : index
    %c0_64 = arith.constant 0 : index
    %99 = vector.load %arg5[%c0_61, %c0_62, %c0_63, %c0_64] : memref<1x1x16x1xf32, #tpu.memory_space<vmem>>, vector<1x1x16x1xf32>
    %100 = vector.shape_cast %99 : vector<1x1x16x1xf32> to vector<16x1xf32>
    %101 = vector.shape_cast %98 : vector<16x1xf32> to vector<1x1x16x1xf32>
    tpu.vector_store %arg5[%c0_61, %c0_62, %c0_63, %c0_64], %101 {strides = array<i32>} : memref<1x1x16x1xf32, #tpu.memory_space<vmem>>, vector<1x1x16x1xf32>,
    %102 = arith.mulf %96, %63 : vector<16x128xf32>
    %cst_65 = arith.constant dense<0.000000e+00> : vector<16xf32>
    %103 = vector.multi_reduction <add>, %102, %cst_65 [1] : vector<16x128xf32> to vector<16xf32>
    %104 = vector.shape_cast %103 : vector<16xf32> to vector<16x1xf32>
    %c0_66 = arith.constant 0 : index
    %c0_67 = arith.constant 0 : index
    %c0_68 = arith.constant 0 : index
    %c0_69 = arith.constant 0 : index
    %105 = vector.load %arg6[%c0_66, %c0_67, %c0_68, %c0_69] : memref<1x1x16x1xf32, #tpu.memory_space<vmem>>, vector<1x1x16x1xf32>
    %106 = vector.shape_cast %105 : vector<1x1x16x1xf32> to vector<16x1xf32>
    %107 = vector.shape_cast %104 : vector<16x1xf32> to vector<1x1x16x1xf32>
    tpu.vector_store %arg6[%c0_66, %c0_67, %c0_68, %c0_69], %107 {strides = array<i32>} : memref<1x1x16x1xf32, #tpu.memory_space<vmem>>, vector<1x1x16x1xf32>,
    return
  }
  func.func @transform_1(%arg0: i32, %arg1: i32) -> (i32, i32) {
    %c0_i32 = arith.constant 0 : i32
    %c0_i32_0 = arith.constant 0 : i32
    %c0_i32_1 = arith.constant 0 : i32
    return %c0_i32, %c0_i32_0 : i32, i32
  }
  func.func @transform_2(%arg0: i32, %arg1: i32) -> (i32, i32, i32) {
    %c0_i32 = arith.constant 0 : i32
    %c0_i32_0 = arith.constant 0 : i32
    return %arg0, %c0_i32, %arg1 : i32, i32, i32
  }
  func.func @transform_3(%arg0: i32, %arg1: i32) -> (i32, i32, i32, i32) {
    %c0_i32 = arith.constant 0 : i32
    %c0_i32_0 = arith.constant 0 : i32
    %c0_i32_1 = arith.constant 0 : i32
    return %arg0, %arg1, %c0_i32, %c0_i32_0 : i32, i32, i32, i32
  }
  func.func @transform_4(%arg0: i32, %arg1: i32) -> (i32, i32, i32, i32) {
    %c0_i32 = arith.constant 0 : i32
    %c0_i32_0 = arith.constant 0 : i32
    %c0_i32_1 = arith.constant 0 : i32
    return %arg0, %arg1, %c0_i32, %c0_i32_0 : i32, i32, i32, i32
  }
}

</mosaic_0001>

<llo_original>
// kernel: tpu_custom_call.1
$region0: #{tpu_custom_call.1}
  #allocation0 [shape = 'u32[]', space=smem, size = 0x4, offset = 0x4, fixed_abs, tag = 'smem constant byte address 0x4 - core index']
  #allocation1 [shape = 'u32[144,128]{1,0:T(1,128)}', space=vmem, size = 0x12000, scoped, tag = 'internal scratch']
  #allocation2 [shape = 'bf16[2,16,256]{2,1,0:T(16,128)(2,1)}', space=vmem, size = 0x4000, scoped, tag = 'scratch operand']
  #allocation3 [shape = 'bf16[144,128]{1,0:T(16,128)(2,1)}', space=vmem, size = 0x9000, scoped, tag = 'scratch operand']
  #allocation4 [shape = 's32[2]{0}', space=sflag, size = 0x8, scoped, tag = 'scratch operand']
  #allocation9 [shape = 's32[]', space=sflag, size = 0x4, offset = 0, fixed_abs, tag = 'sflag constant byte address 0x0 - dummy sync flag']
  #allocation11 [shape = 's32[]', space=sflag, size = 0x4, offset = 0, fixed_abs, tag = 'sflag constant byte address 0x0 - dummy sync flag']
  %s0 = inlined_call_operand.hbm [shape: bf16[2,16,512], index: 0, kind: input, shape index: {}]
  %s1 = inlined_call_operand.hbm [shape: bf16[16,144], index: 1, kind: input, shape index: {}]
  %s2 = inlined_call_operand.hbm [shape: bf16[2,16,384], index: 2, kind: output, shape index: {0}]
  %s3 = inlined_call_operand.vmem [shape: f32[2,3,16,1], index: 3, kind: output, shape index: {1}]
  %s4 = inlined_call_operand.vmem [shape: f32[2,3,16,1], index: 4, kind: output, shape index: {2}]
  %5 = xla_tuple %s2, %s3, %s4
  %s6 = sld [smem:[#allocation0]]
  $region65: #{tpu_custom_call.1} parent=0
    _
  %s8 = ssub.s32 1, %s6
  %s9 = scalar_select 0, %s8, %s6
  $region1: #{tpu_custom_call.1} parent=0
    #allocation5 [shape = 'u8[8192]{0}', space=vmem, size = 0x2000, scoped, tag = 'input window, operand 1, single buffered']
    #allocation6 [shape = 's32[2]{0}', space=sflag, size = 0x8, scoped, tag = 'scoped memory for tpu_custom_call.1']
    #allocation7 [shape = 's32[2]{0}', space=sflag, size = 0x8, scoped, tag = 'scoped memory for tpu_custom_call.1']
    #allocation8 [shape = 'u8[8192]{0}', space=vmem, size = 0x2000, scoped, tag = 'output window, operand 0']
    %10 = vsyncpa [#allocation6], 0
    %11 = vsyncpa [#allocation7], 0
    %s12 = scalar_lea.sflag [#allocation7], 1
    %13 = vsyncpa %s12, 0
    loop: start=0, step=1, limit=8
    $region2: #{tpu_custom_call.1} parent=1 // loop_pre_header
      _
    $region3: #{tpu_custom_call.1} parent=1 // loop_header
      %s15 = sphi 0, %s19
      %p16 = scmp.ge.s32.totalorder %s15, 8
      %s22 = sphi 0, %s34
      %s23 = sphi 0, %s30
      %s24 = sphi 0, %s22
      %s25 = sphi 0, %s23
      %s26 = sphi 0, %s24
      %s27 = sphi 0, %s25
      %s35 = sphi 0, %s35
      %s37 = sphi 0, %s35
      %s38 = sphi 0, %s37
      %s52 = sphi 0, %s38
      %s60 = sphi 0, %s62
      %s63 = sphi 0, %s60
      %s64 = sphi 0, %s63
      %s80 = sphi 0, %s64
      %s88 = sphi 0, %s90
      %s91 = sphi 0, %s88
      %s92 = sphi 0, %s91
      %s108 = sphi 0, %s92
      %s116 = sphi 0, %s118
      %s119 = sphi 0, %s116
      %s120 = sphi 0, %s119
      %s136 = sphi 0, %s120
    $region4: #{tpu_custom_call.1} parent=1 // loop_header_branch
      %18 = sbr.rel (%p16) target = $region8
    $region5: #{tpu_custom_call.1} parent=1 // loop_body
      %s20 = ssub.s32 %s15, 1
      %s21 = ssub.s32 %s15, 2
      %s28 = sadd.s32 1, %s23
      %p29 = scmp.ge.s32.totalorder %s28, 3
      %s30 = scalar_select %p29, 0, %s28
      %s31 = sadd.s32 1, %s22
      %s32 = scalar_select %p29, %s31, %s22
      %p33 = scmp.ge.s32.totalorder %s32, 2
      %s34 = scalar_select %p33, 0, %s32
      %s36 = sadd.s32 %s35, 1
      %p39 = scmp.eq.s32.totalorder %s15, 5
      %p40 = scmp.ne.s32.totalorder %s35, %s37
      %p41 = scmp.eq.s32.totalorder %s15, 0
      %p42 = por %p40, %p41
      %p43 = scmp.ne.s32.totalorder %s35, %s37
      %p44 = scmp.eq.s32.totalorder %s20, 5
      %p45 = por %p43, %p44
      %p46 = scmp.ne.s32.totalorder %s37, %s38
      %p47 = scmp.eq.s32.totalorder %s20, 0
      %p48 = por %p46, %p47
      %p49 = scmp.ne.s32.totalorder %s37, %s38
      %p50 = scmp.eq.s32.totalorder %s21, 5
      %p51 = por %p49, %p50
      %p53 = scmp.ne.s32.totalorder %s38, %s52
      %p54 = scmp.eq.s32.totalorder %s21, 0
      %p55 = por %p53, %p54
      %s56 = ssub.s32 %s22, %s34
      %s57 = ssub.s32 %s23, %s30
      %s58 = sor.u32 %s56, %s57
      %p59 = scmp.eq.s32.totalorder %s58, 0
      %s61 = sadd.s32 %s60, 1
      %s62 = scalar_select %p59, %s60, %s61
      %p65 = pneg %p59
      %p66 = scmp.eq.s32.totalorder %s15, 5
      %p67 = por %p65, %p66
      %p68 = scmp.ne.s32.totalorder %s60, %s63
      %p69 = scmp.eq.s32.totalorder %s15, 0
      %p70 = por %p68, %p69
      %p71 = scmp.ne.s32.totalorder %s60, %s63
      %p72 = scmp.eq.s32.totalorder %s20, 5
      %p73 = por %p71, %p72
      %p74 = scmp.ne.s32.totalorder %s63, %s64
      %p75 = scmp.eq.s32.totalorder %s20, 0
      %p76 = por %p74, %p75
      %p77 = scmp.ne.s32.totalorder %s63, %s64
      %p78 = scmp.eq.s32.totalorder %s21, 5
      %p79 = por %p77, %p78
      %p81 = scmp.ne.s32.totalorder %s64, %s80
      %p82 = scmp.eq.s32.totalorder %s21, 0
      %p83 = por %p81, %p82
      %s84 = ssub.s32 %s22, %s34
      %s85 = ssub.s32 %s23, %s30
      %s86 = sor.u32 %s84, %s85
      %p87 = scmp.eq.s32.totalorder %s86, 0
      %s89 = sadd.s32 %s88, 1
      %s90 = scalar_select %p87, %s88, %s89
      %p93 = pneg %p87
      %p94 = scmp.eq.s32.totalorder %s15, 5
      %p95 = por %p93, %p94
      %p96 = scmp.ne.s32.totalorder %s88, %s91
      %p97 = scmp.eq.s32.totalorder %s15, 0
      %p98 = por %p96, %p97
      %p99 = scmp.ne.s32.totalorder %s88, %s91
      %p100 = scmp.eq.s32.totalorder %s20, 5
      %p101 = por %p99, %p100
      %p102 = scmp.ne.s32.totalorder %s91, %s92
      %p103 = scmp.eq.s32.totalorder %s20, 0
      %p104 = por %p102, %p103
      %p105 = scmp.ne.s32.totalorder %s91, %s92
      %p106 = scmp.eq.s32.totalorder %s21, 5
      %p107 = por %p105, %p106
      %p109 = scmp.ne.s32.totalorder %s92, %s108
      %p110 = scmp.eq.s32.totalorder %s21, 0
      %p111 = por %p109, %p110
      %s112 = ssub.s32 %s22, %s34
      %s113 = ssub.s32 %s23, %s30
      %s114 = sor.u32 %s112, %s113
      %p115 = scmp.eq.s32.totalorder %s114, 0
      %s117 = sadd.s32 %s116, 1
      %s118 = scalar_select %p115, %s116, %s117
      %p121 = pneg %p115
      %p122 = scmp.eq.s32.totalorder %s15, 5
      %p123 = por %p121, %p122
      %p124 = scmp.ne.s32.totalorder %s116, %s119
      %p125 = scmp.eq.s32.totalorder %s15, 0
      %p126 = por %p124, %p125
      %p127 = scmp.ne.s32.totalorder %s116, %s119
      %p128 = scmp.eq.s32.totalorder %s20, 5
      %p129 = por %p127, %p128
      %p130 = scmp.ne.s32.totalorder %s119, %s120
      %p131 = scmp.eq.s32.totalorder %s20, 0
      %p132 = por %p130, %p131
      %p133 = scmp.ne.s32.totalorder %s119, %s120
      %p134 = scmp.eq.s32.totalorder %s21, 5
      %p135 = por %p133, %p134
      %p137 = scmp.ne.s32.totalorder %s120, %s136
      %p138 = scmp.eq.s32.totalorder %s21, 0
      %p139 = por %p137, %p138
      %p140 = scmp.le.s32.totalorder 1, %s15
      %p141 = scmp.lt.s32.totalorder %s15, 7
      %p142 = pnand %p140, %p141
      %p143 = pneg %p142
      // Predicated region
      $region9: #{tpu_custom_call.1} parent=5 // pred_check
        _
      $region10: #{tpu_custom_call.1} parent=5 // pred_check_branch
        %145 = sbr.rel (%p142) target = $region12
      $region11: #{tpu_custom_call.1} parent=5 // pred_region
        %s146 = ssub.s32 %s15, 1
        // Predicated region
        $region13: #{tpu_custom_call.1} parent=11 // pred_check
          %p147 = pneg %p48
        $region14: #{tpu_custom_call.1} parent=11 // pred_check_branch
          %149 = sbr.rel (%p147) target = $region16
        $region15: #{tpu_custom_call.1} parent=11 // pred_region
          %s151 = ssub.s32 256, 256
          %152 = vsyncadd [#allocation6], %s151
          %s153 = sshll.u32 [#allocation5], 4
          %s154 = int_to_ptr.vmem [resolvable:$true] %s153
          %159 = dma.hbm_to_vmem [thread:$0]  %s1, 256, %s154, [#allocation6], 128, 128, 8
        $region16: #{tpu_custom_call.1} parent=11 // pred_fallthru
          _
      $region12: #{tpu_custom_call.1} parent=5 // pred_fallthru
        _
      %p160 = scmp.lt.s32.totalorder %s15, 6
      // Predicated region
      $region17: #{tpu_custom_call.1} parent=5 // pred_check
        %p161 = pneg %p160
      $region18: #{tpu_custom_call.1} parent=5 // pred_check_branch
        %163 = sbr.rel (%p161) target = $region20
      $region19: #{tpu_custom_call.1} parent=5 // pred_region
        _
      $region20: #{tpu_custom_call.1} parent=5 // pred_fallthru
        _
      %p164 = scmp.le.s32.totalorder 1, %s15
      %p165 = scmp.lt.s32.totalorder %s15, 7
      %p166 = pnand %p164, %p165
      %p167 = pneg %p166
      // Predicated region
      $region21: #{tpu_custom_call.1} parent=5 // pred_check
        _
      $region22: #{tpu_custom_call.1} parent=5 // pred_check_branch
        %169 = sbr.rel (%p166) target = $region24
      $region23: #{tpu_custom_call.1} parent=5 // pred_region
        %s170 = ssub.s32 %s15, 1
        // Predicated region
        $region25: #{tpu_custom_call.1} parent=23 // pred_check
          %p171 = pneg %p48
        $region26: #{tpu_custom_call.1} parent=23 // pred_check_branch
          %173 = sbr.rel (%p171) target = $region28
        $region27: #{tpu_custom_call.1} parent=23 // pred_region
          %174 = dma.done [#allocation6], 256
        $region28: #{tpu_custom_call.1} parent=23 // pred_fallthru
          _
        %p175 = pneg %p48
        %p176 = pneg %p45
        %p177 = pneg %p76
        %p178 = pneg %p73
        %s179 = sand.u32 %s63, 1
        %s180 = scalar_lea.sflag [#allocation7], %s179
        %s181 = sand.u32 %s63, 1
        %s182 = smul.addr %s181, 8
        %s183 = scalar_lea.vmem [#allocation8], %s182
        %p184 = pneg %p104
        %p185 = pneg %p101
        %p186 = scmp.lt.s32.totalorder %s24, 1
        %s187 = scalar_select %p186, %s24, 1
        %p188 = scmp.lt.s32.totalorder %s25, 2
        %s189 = scalar_select %p188, %s25, 2
        %s190 = smul.addr %s189, 2
        %s191 = smul.addr %s187, 6
        %s192 = sadd.s32 %s190, %s191
        %s193 = smul.addr %s192, 8
        %s194 = scalar_lea.vmem %s3, %s193
        %p195 = pneg %p132
        %p196 = pneg %p129
        %p197 = scmp.lt.s32.totalorder %s24, 1
        %s198 = scalar_select %p197, %s24, 1
        %p199 = scmp.lt.s32.totalorder %s25, 2
        %s200 = scalar_select %p199, %s25, 2
        %s201 = smul.addr %s200, 2
        %s202 = smul.addr %s198, 6
        %s203 = sadd.s32 %s201, %s202
        %s204 = smul.addr %s203, 8
        %s205 = scalar_lea.vmem %s4, %s204
        %p206 = scmp.lt.s32.totalorder %s24, 1
        %s207 = scalar_select %p206, %s24, 1
        %p208 = scmp.lt.s32.totalorder %s25, 2
        %s209 = scalar_select %p208, %s25, 2
        %s210 = smul.addr %s209, 2
        %s211 = smul.addr %s207, 6
        %s212 = sadd.s32 %s210, %s211
        %s213 = smul.addr %s212, 8
        %s214 = scalar_lea.vmem %s3, %s213
        %p215 = scmp.lt.s32.totalorder %s24, 1
        %s216 = scalar_select %p215, %s24, 1
        %p217 = scmp.lt.s32.totalorder %s25, 2
        %s218 = scalar_select %p217, %s25, 2
        %s219 = smul.addr %s218, 2
        %s220 = smul.addr %s216, 6
        %s221 = sadd.s32 %s219, %s220
        %s222 = smul.addr %s221, 8
        %s223 = scalar_lea.vmem %s4, %s222
        %p225 = scmp.eq.s32.totalorder %s25, 0
        // Predicated region
        $region29: #{tpu_custom_call.1} parent=23 // pred_check
          %p226 = pneg %p225
        $region30: #{tpu_custom_call.1} parent=23 // pred_check_branch
          %228 = sbr.rel (%p226) target = $region32
        $region31: #{tpu_custom_call.1} parent=23 // pred_region
          #allocation10 [shape = 'u32[6]{0}', space=smem, size = 0x18, scoped, tag = 'DMA stride descriptor']
          %s229 = smul.u32 %s25, 128
          %s230 = sshra.s32 %s229, 7
          %s231 = sand.u32 %s229, 127
          %s232 = smul.u32 %s24, 8
          %s233 = sadd.s32 %s230, %s232
          %s234 = smul.addr %s233, 64
          %s235 = scalar_lea.hbm %s0, %s234
          %s237 = sshll.u32 1, 14
          %s238 = sxor.u32 4294967295, %s237
          %s240 = sld [smem:[#allocation0]]
          %s241 = sadd.s32 2, %s240
          %s243 = sshll.u32 7, 26
          %s244 = sxor.u32 4294967295, %s243
          %s245 = sand.u32 0, %s244
          %s246 = sshll.u32 %s241, 26
          %s247 = sor.u32 %s245, %s246
          %s248 = sshll.u32 [#allocation2], 4
          %s249 = int_to_ptr.vmem [resolvable:$true] %s248
          %252 = sst [smem:[#allocation10]] 64
          %s253 = scalar_lea.smem [#allocation10], 1
          %254 = sst [smem:[%s253]] 128
          %s255 = scalar_lea.smem [#allocation10], 2
          %256 = sst [smem:[%s255]] 2
          %s257 = scalar_lea.smem [#allocation10], 3
          %258 = sst [smem:[%s257]] 256
          %s259 = scalar_lea.smem [#allocation10], 4
          %260 = sst [smem:[%s259]] 64
          %s261 = scalar_lea.smem [#allocation10], 5
          %262 = sst [smem:[%s261]] 4
          %264 = dma.general %s235, 256, %s249, [#allocation4], [#allocation9], [#allocation10], %s247, 0
        $region32: #{tpu_custom_call.1} parent=23 // pred_fallthru
          _
        %s265 = sadd.s32 %s25, 1
        %p266 = scmp.lt.s32.totalorder %s265, 3
        // Predicated region
        $region33: #{tpu_custom_call.1} parent=23 // pred_check
          %p267 = pneg %p266
        $region34: #{tpu_custom_call.1} parent=23 // pred_check_branch
          %269 = sbr.rel (%p267) target = $region36
        $region35: #{tpu_custom_call.1} parent=23 // pred_region
          #allocation12 [shape = 'u32[6]{0}', space=smem, size = 0x18, scoped, tag = 'DMA stride descriptor']
          %p270 = scmp.lt.s32.totalorder %s265, 0
          %s271 = ssub.s32 0, %s265
          %s272 = scalar_select %p270, %s271, %s265
          %s273 = sand.u32 %s272, 1
          %s274 = ssub.s32 0, %s273
          %s275 = scalar_select %p270, %s274, %s273
          %p276 = scmp.ne.s32.totalorder %s275, 0
          %p277 = scmp.lt.s32.totalorder %s275, 0
          %p278 = pnand %p277, %p276
          %p279 = pneg %p278
          %s280 = sadd.s32 %s275, 2
          %s281 = scalar_select %p279, %s280, %s275
          %s282 = smul.u32 %s265, 128
          %s283 = sshra.s32 %s282, 7
          %s284 = sand.u32 %s282, 127
          %s285 = smul.u32 %s24, 8
          %s286 = sadd.s32 %s283, %s285
          %s287 = smul.addr %s286, 64
          %s288 = scalar_lea.hbm %s0, %s287
          %s289 = smul.u32 %s281, 2
          %s290 = smul.addr %s289, 8
          %s291 = scalar_lea.vmem [#allocation2], %s290
          %s292 = scalar_lea.sflag [#allocation4], %s281
          %s294 = sshll.u32 1, 14
          %s295 = sxor.u32 4294967295, %s294
          %s297 = sld [smem:[#allocation0]]
          %s298 = sadd.s32 2, %s297
          %s300 = sshll.u32 7, 26
          %s301 = sxor.u32 4294967295, %s300
          %s302 = sand.u32 0, %s301
          %s303 = sshll.u32 %s298, 26
          %s304 = sor.u32 %s302, %s303
          %s305 = sshll.u32 %s291, 4
          %s306 = int_to_ptr.vmem [resolvable:$true] %s305
          %309 = sst [smem:[#allocation12]] 64
          %s310 = scalar_lea.smem [#allocation12], 1
          %311 = sst [smem:[%s310]] 128
          %s312 = scalar_lea.smem [#allocation12], 2
          %313 = sst [smem:[%s312]] 2
          %s314 = scalar_lea.smem [#allocation12], 3
          %315 = sst [smem:[%s314]] 256
          %s316 = scalar_lea.smem [#allocation12], 4
          %317 = sst [smem:[%s316]] 64
          %s318 = scalar_lea.smem [#allocation12], 5
          %319 = sst [smem:[%s318]] 4
          %321 = dma.general %s288, 256, %s306, %s292, [#allocation11], [#allocation12], %s304, 0
        $region36: #{tpu_custom_call.1} parent=23 // pred_fallthru
          _
        %p322 = scmp.lt.s32.totalorder %s25, 0
        %s323 = ssub.s32 0, %s25
        %s324 = scalar_select %p322, %s323, %s25
        %s325 = sand.u32 %s324, 1
        %s326 = ssub.s32 0, %s325
        %s327 = scalar_select %p322, %s326, %s325
        %p328 = scmp.ne.s32.totalorder %s327, 0
        %p329 = scmp.lt.s32.totalorder %s327, 0
        %p330 = pnand %p329, %p328
        %p331 = pneg %p330
        %s332 = sadd.s32 %s327, 2
        %s333 = scalar_select %p331, %s332, %s327
        %s334 = smul.u32 %s25, 128
        %s335 = smul.u32 %s333, 2
        %s336 = smul.addr %s335, 8
        %s337 = scalar_lea.vmem [#allocation2], %s336
        %s338 = scalar_lea.sflag [#allocation4], %s333
        %s339 = smul.u32 4, 2
        %s340 = smul.u32 %s339, 2
        %s341 = sshll.u32 %s340, 4
        %342 = dma.done %s338, %s341
        %v343 = vld [vmem:[%s337] sm:$0xff]
        %344 = vst [vmem:[#allocation3] sm:$0xff] %v343
        %v345 = vld [vmem:[%s337] sm:$0xff]
        %v346 = vld [vmem:[%s337 + $0x8] sm:$0xff]
        %349 = vrot.lane.b32.xlu0 %v345, 127
        %v350 = vpop.permute.xlu0 %349
        %351 = vrot.lane.b32.xlu0 %v346, 127
        %v352 = vpop.permute.xlu0 %351
        %vm353 = vcmask 1039360
        %v354 = vsel %vm353, %v350, %v352
        %356 = vst [vmem:[#allocation3 + $0x8] sm:$0xff] %v354
        %v357 = vld [vmem:[%s337] sm:$0xff]
        %v358 = vld [vmem:[%s337 + $0x8] sm:$0xff]
        %361 = vrot.lane.b32.xlu0 %v357, 126
        %v362 = vpop.permute.xlu0 %361
        %363 = vrot.lane.b32.xlu0 %v358, 126
        %v364 = vpop.permute.xlu0 %363
        %vm365 = vcmask 1031168
        %v366 = vsel %vm365, %v362, %v364
        %368 = vst [vmem:[#allocation3 + $0x10] sm:$0xff] %v366
        %v369 = vld [vmem:[%s337] sm:$0xff]
        %v370 = vld [vmem:[%s337 + $0x8] sm:$0xff]
        %373 = vrot.lane.b32.xlu0 %v369, 110
        %v374 = vpop.permute.xlu0 %373
        %375 = vrot.lane.b32.xlu0 %v370, 110
        %v376 = vpop.permute.xlu0 %375
        %vm377 = vcmask 900096
        %v378 = vsel %vm377, %v374, %v376
        %380 = vst [vmem:[#allocation3 + $0x18] sm:$0xff] %v378
        %v381 = vld [vmem:[%s337] sm:$0xff]
        %v382 = vld [vmem:[%s337 + $0x8] sm:$0xff]
        %385 = vrot.lane.b32.xlu0 %v381, 109
        %v386 = vpop.permute.xlu0 %385
        %387 = vrot.lane.b32.xlu0 %v382, 109
        %v388 = vpop.permute.xlu0 %387
        %vm389 = vcmask 891904
        %v390 = vsel %vm389, %v386, %v388
        %392 = vst [vmem:[#allocation3 + $0x20] sm:$0xff] %v390
        %v393 = vld [vmem:[%s337] sm:$0xff]
        %v394 = vld [vmem:[%s337 + $0x8] sm:$0xff]
        %397 = vrot.lane.b32.xlu0 %v393, 108
        %v398 = vpop.permute.xlu0 %397
        %399 = vrot.lane.b32.xlu0 %v394, 108
        %v400 = vpop.permute.xlu0 %399
        %vm401 = vcmask 883712
        %v402 = vsel %vm401, %v398, %v400
        %404 = vst [vmem:[#allocation3 + $0x28] sm:$0xff] %v402
        %v405 = vld [vmem:[%s337] sm:$0xff]
        %v406 = vld [vmem:[%s337 + $0x8] sm:$0xff]
        %409 = vrot.lane.b32.xlu0 %v405, 92
        %v410 = vpop.permute.xlu0 %409
        %411 = vrot.lane.b32.xlu0 %v406, 92
        %v412 = vpop.permute.xlu0 %411
        %vm413 = vcmask 752640
        %v414 = vsel %vm413, %v410, %v412
        %416 = vst [vmem:[#allocation3 + $0x30] sm:$0xff] %v414
        %v417 = vld [vmem:[%s337] sm:$0xff]
        %v418 = vld [vmem:[%s337 + $0x8] sm:$0xff]
        %421 = vrot.lane.b32.xlu0 %v417, 91
        %v422 = vpop.permute.xlu0 %421
        %423 = vrot.lane.b32.xlu0 %v418, 91
        %v424 = vpop.permute.xlu0 %423
        %vm425 = vcmask 744448
        %v426 = vsel %vm425, %v422, %v424
        %428 = vst [vmem:[#allocation3 + $0x38] sm:$0xff] %v426
        %v429 = vld [vmem:[%s337] sm:$0xff]
        %v430 = vld [vmem:[%s337 + $0x8] sm:$0xff]
        %433 = vrot.lane.b32.xlu0 %v429, 90
        %v434 = vpop.permute.xlu0 %433
        %435 = vrot.lane.b32.xlu0 %v430, 90
        %v436 = vpop.permute.xlu0 %435
        %vm437 = vcmask 736256
        %v438 = vsel %vm437, %v434, %v436
        %440 = vst [vmem:[#allocation3 + $0x40] sm:$0xff] %v438
        %v441 = vld [vmem:[#allocation5] sm:$0xff]
        %v442 = vld [vmem:[#allocation5 + $0x8] sm:$0xff]
        %v443 = vld [vmem:[#allocation3] sm:$0xff]
        %v444 = vld [vmem:[#allocation3 + $0x8] sm:$0xff]
        %v445 = vld [vmem:[#allocation3 + $0x10] sm:$0xff]
        %v446 = vld [vmem:[#allocation3 + $0x18] sm:$0xff]
        %v447 = vld [vmem:[#allocation3 + $0x20] sm:$0xff]
        %v448 = vld [vmem:[#allocation3 + $0x28] sm:$0xff]
        %v449 = vld [vmem:[#allocation3 + $0x30] sm:$0xff]
        %v450 = vld [vmem:[#allocation3 + $0x38] sm:$0xff]
        %v451 = vld [vmem:[#allocation3 + $0x40] sm:$0xff]
        %v454 = vunpack.c.l.b16 %v441
        %v455 = vunpack.c.h.b16 %v441
        %v456 = vunpack.c.l.b16 %v442
        %v457 = vunpack.c.h.b16 %v442
        %v458 = vpack.c.b16 %v456, %v454
        %v459 = vpack.c.b16 %v457, %v455
        %vm461 = vcmask 130048
        %v463 = vsel %vm461, %v459, 0
        %465 = vmatprep.subr.bf16.mxu0 0
        %466 = vmatpush1.bf16.msra.mxu0 %v443
        %467 = vmatprep.subr.bf16.mxu0 0
        %468 = vmatpush1.bf16.msra.mxu0 %v444
        %469 = vmatprep.subr.bf16.mxu0 0
        %470 = vmatpush1.bf16.msra.mxu0 %v445
        %471 = vmatprep.subr.bf16.mxu0 0
        %472 = vmatpush1.bf16.msra.mxu0 %v446
        %473 = vmatprep.subr.bf16.mxu0 0
        %474 = vmatpush1.bf16.msra.mxu0 %v447
        %475 = vmatprep.subr.bf16.mxu0 0
        %476 = vmatpush1.bf16.msra.mxu0 %v448
        %477 = vmatprep.subr.bf16.mxu0 0
        %478 = vmatpush1.bf16.msra.mxu0 %v449
        %479 = vmatprep.subr.bf16.mxu0 0
        %480 = vmatpush1.bf16.msra.mxu0 %v450
        %481 = vmatprep.subr.bf16.mxu0 0
        %482 = vmatpush1.bf16.msra.mxu0 %v451
        %483 = vmatprep.subr.bf16.mxu0 0
        %484 = vmatpush1.bf16.msra.mxu0 0
        %485 = vmatprep.subr.bf16.mxu0 0
        %486 = vmatpush1.bf16.msra.mxu0 0
        %487 = vmatprep.subr.bf16.mxu0 0
        %488 = vmatpush1.bf16.msra.mxu0 0
        %489 = vmatprep.subr.bf16.mxu0 0
        %490 = vmatpush1.bf16.msra.mxu0 0
        %491 = vmatprep.subr.bf16.mxu0 0
        %492 = vmatpush1.bf16.msra.mxu0 0
        %493 = vmatprep.subr.bf16.mxu0 0
        %494 = vmatpush1.bf16.msra.mxu0 0
        %495 = vmatprep.subr.bf16.mxu0 0
        %496 = vmatpush1.bf16.msra.mxu0 0
        %497 = vmatprep.mubr.bf16.mxu0 %v463
        %498 = vmatmul.mubr.bf16.gmra.mrb[0].mxu0 %v458
        %v499 = vpop.f32.mrb[0].mxu0
        %v500 = vadd.f32 0.0, %v499
        %v501 = vpop.f32.mrb[0].mxu0
        %v502 = vpop.f32.mrb[0].mxu0
        %v503 = vadd.f32 0.0, %v502
        %v504 = vpop.f32.mrb[0].mxu0
        %505 = vdwg.mxu0
        %v506 = vpack.c.bf16 %v503, %v500
        %v508 = vunpack.c.l.b16 %v506
        %v509 = vunpack.c.h.b16 %v506
        %v510 = vpack.c.b16 %v508, %v508
        %v511 = vpack.c.b16 %v509, %v509
        %514 = vst [vmem:[%s183] sm:$0xf] %v510
        %515 = vst [vmem:[%s183 + $0x4] sm:$0xf] %v511
        %v516 = vlaneseq
        %v517 = vand.u32 %v516, 127
        %v518 = vstv %s334
        %v519 = vadd.s32 %v518, %v517
        %vm520 = vcmp.lt.s32.totalorder %v519, 0
        %v521 = vsub.s32 0, %v519
        %v522 = vsel %vm520, %v521, %v519
        %v523 = vmul.u32.u64.compose %v522, 3817748708
        %v524 = vextract.low.u32 %v523
        %v525 = vextract.high.u32 %v523
        %v526 = vshrl.u32 %v525, 4
        %v527 = vmul.u32 %v526, 18
        %v528 = vsub.s32 %v522, %v527
        %v529 = vsub.s32 0, %v528
        %v530 = vsel %vm520, %v529, %v528
        %vm531 = vcmp.ne.s32.totalorder %v530, 0
        %vm532 = vcmp.lt.s32.totalorder %v530, 0
        %vm533 = vmand %vm532, %vm531
        %v534 = vadd.s32 %v530, 18
        %v535 = vsel %vm533, %v534, %v530
        %vm536 = vcmp.lt.s32.totalorder %v535, 16
        %vm537 = vcmp.lt.s32.totalorder %v519, 288
        %vm538 = vmand %vm536, %vm537
        %v539 = vsel %vm538, 1, 0
        %v540 = vcvt.s32.f32 %v539
        %v541 = vmul.f32 %v500, %v540
        %v542 = vmul.f32 %v503, %v540
        %543 = vadd.xlane.f32.xlu0 %v541
        %v544 = vpop.xlane.xlu0 %543
        %545 = vadd.xlane.f32.xlu0 %v542
        %v546 = vpop.xlane.xlu0 %545
        %vm547 = vcmask 7168
        %548 = vst.msk [vmem:[%s214] sm:$0xff] %vm547, %v544
        %549 = vst.msk [vmem:[%s214 + $0x8] sm:$0xff] %vm547, %v546
        %v550 = vmul.f32 %v541, %v500
        %v551 = vmul.f32 %v542, %v503
        %552 = vadd.xlane.f32.xlu0 %v550
        %v553 = vpop.xlane.xlu0 %552
        %554 = vadd.xlane.f32.xlu0 %v551
        %v555 = vpop.xlane.xlu0 %554
        %556 = vst.msk [vmem:[%s223] sm:$0xff] %vm547, %v553
        %557 = vst.msk [vmem:[%s223 + $0x8] sm:$0xff] %vm547, %v555
        %s558 = sand.u32 %s63, 1
        %s559 = scalar_lea.sflag [#allocation7], %s558
        %s560 = sand.u32 %s63, 1
        %s561 = smul.addr %s560, 8
        %s562 = scalar_lea.vmem [#allocation8], %s561
        %p563 = scmp.lt.s32.totalorder %s24, 1
        %s564 = scalar_select %p563, %s24, 1
        %p565 = scmp.lt.s32.totalorder %s25, 2
        %s566 = scalar_select %p565, %s25, 2
        %s567 = smul.addr %s566, 2
        %s568 = smul.addr %s564, 6
        %s569 = sadd.s32 %s567, %s568
        %s570 = smul.addr %s569, 8
        %s571 = scalar_lea.vmem %s3, %s570
        %p572 = scmp.lt.s32.totalorder %s24, 1
        %s573 = scalar_select %p572, %s24, 1
        %p574 = scmp.lt.s32.totalorder %s25, 2
        %s575 = scalar_select %p574, %s25, 2
        %s576 = smul.addr %s575, 2
        %s577 = smul.addr %s573, 6
        %s578 = sadd.s32 %s576, %s577
        %s579 = smul.addr %s578, 8
        %s580 = scalar_lea.vmem %s4, %s579
        // Predicated region
        $region37: #{tpu_custom_call.1} parent=23 // pred_check
          %p581 = pneg %p73
        $region38: #{tpu_custom_call.1} parent=23 // pred_check_branch
          %583 = sbr.rel (%p581) target = $region40
        $region39: #{tpu_custom_call.1} parent=23 // pred_region
          %s585 = ssub.s32 128, 128
          %586 = vsyncadd %s559, %s585
          %s587 = smul.addr %s24, 6
          %s588 = sadd.s32 %s25, %s587
          %s589 = smul.addr %s588, 64
          %s590 = scalar_lea.hbm %s2, %s589
          %s591 = sshll.u32 %s562, 4
          %s592 = int_to_ptr.vmem [resolvable:$true] %s591
          %597 = dma.vmem_to_hbm [thread:$0]  %s592, 128, %s590, %s559, 64, 192, 4
        $region40: #{tpu_custom_call.1} parent=23 // pred_fallthru
          _
        // Predicated region
        $region41: #{tpu_custom_call.1} parent=23 // pred_check
          %p598 = pneg %p101
        $region42: #{tpu_custom_call.1} parent=23 // pred_check_branch
          %600 = sbr.rel (%p598) target = $region44
        $region43: #{tpu_custom_call.1} parent=23 // pred_region
          _
        $region44: #{tpu_custom_call.1} parent=23 // pred_fallthru
          _
        // Predicated region
        $region45: #{tpu_custom_call.1} parent=23 // pred_check
          %p601 = pneg %p129
        $region46: #{tpu_custom_call.1} parent=23 // pred_check_branch
          %603 = sbr.rel (%p601) target = $region48
        $region47: #{tpu_custom_call.1} parent=23 // pred_region
          _
        $region48: #{tpu_custom_call.1} parent=23 // pred_fallthru
          _
      $region24: #{tpu_custom_call.1} parent=5 // pred_fallthru
        _
      %p604 = scmp.le.s32.totalorder 2, %s15
      // Predicated region
      $region49: #{tpu_custom_call.1} parent=5 // pred_check
        %p605 = pneg %p604
      $region50: #{tpu_custom_call.1} parent=5 // pred_check_branch
        %607 = sbr.rel (%p605) target = $region52
      $region51: #{tpu_custom_call.1} parent=5 // pred_region
        %s608 = ssub.s32 %s15, 2
        // Predicated region
        $region53: #{tpu_custom_call.1} parent=51 // pred_check
          %p609 = pneg %p79
        $region54: #{tpu_custom_call.1} parent=51 // pred_check_branch
          %611 = sbr.rel (%p609) target = $region56
        $region55: #{tpu_custom_call.1} parent=51 // pred_region
          %s612 = sand.u32 %s64, 1
          %s613 = scalar_lea.sflag [#allocation7], %s612
          %s614 = sand.u32 %s64, 1
          %s615 = smul.addr %s614, 8
          %s616 = scalar_lea.vmem [#allocation8], %s615
          %617 = dma.done %s613, 128
        $region56: #{tpu_custom_call.1} parent=51 // pred_fallthru
          _
        // Predicated region
        $region57: #{tpu_custom_call.1} parent=51 // pred_check
          %p618 = pneg %p107
        $region58: #{tpu_custom_call.1} parent=51 // pred_check_branch
          %620 = sbr.rel (%p618) target = $region60
        $region59: #{tpu_custom_call.1} parent=51 // pred_region
          %p621 = scmp.lt.s32.totalorder %s26, 1
          %s622 = scalar_select %p621, %s26, 1
          %p623 = scmp.lt.s32.totalorder %s27, 2
          %s624 = scalar_select %p623, %s27, 2
          %s625 = smul.addr %s624, 2
          %s626 = smul.addr %s622, 6
          %s627 = sadd.s32 %s625, %s626
          %s628 = smul.addr %s627, 8
          %s629 = scalar_lea.vmem %s3, %s628
        $region60: #{tpu_custom_call.1} parent=51 // pred_fallthru
          _
        // Predicated region
        $region61: #{tpu_custom_call.1} parent=51 // pred_check
          %p630 = pneg %p135
        $region62: #{tpu_custom_call.1} parent=51 // pred_check_branch
          %632 = sbr.rel (%p630) target = $region64
        $region63: #{tpu_custom_call.1} parent=51 // pred_region
          %p633 = scmp.lt.s32.totalorder %s26, 1
          %s634 = scalar_select %p633, %s26, 1
          %p635 = scmp.lt.s32.totalorder %s27, 2
          %s636 = scalar_select %p635, %s27, 2
          %s637 = smul.addr %s636, 2
          %s638 = smul.addr %s634, 6
          %s639 = sadd.s32 %s637, %s638
          %s640 = smul.addr %s639, 8
          %s641 = scalar_lea.vmem %s4, %s640
        $region64: #{tpu_custom_call.1} parent=51 // pred_fallthru
          _
      $region52: #{tpu_custom_call.1} parent=5 // pred_fallthru
        _
    $region6: #{tpu_custom_call.1} parent=1 // loop_footer
      %s19 = sadd.s32 1, %s15
    $region7: #{tpu_custom_call.1} parent=1 // loop_footer_branch
      %14 = sbr.rel target = $region3
    $region8: #{tpu_custom_call.1} parent=1 // loop_exit
      _
    %642 = vsyncpa [#allocation6], 1
    %s643 = scalar_lea.sflag [#allocation6], 1
    %644 = vsyncpa %s643, 1
    %645 = vsyncpa [#allocation7], 1
    %s646 = scalar_lea.sflag [#allocation7], 1
    %647 = vsyncpa %s646, 1
  %648 = vsyncmov [#allocation4]
  %s649 = vpop.sfrf %648
  %p650 = scmp.eq.s32.totalorder %s649, 0
  %p651 = pneg %p650
  %653 = shalt.err (%p651)
  %s654 = scalar_lea.sflag [#allocation4], 1
  %655 = vsyncmov %s654
  %s656 = vpop.sfrf %655
  %p657 = scmp.eq.s32.totalorder %s656, 0
  %p658 = pneg %p657
  %660 = shalt.err (%p658)

</llo_original>
